<compile_context>
chip_gen: v5e
topology: v5e:2x2
jax: 0.10.0
libtpu: 0.0.40
codegen_flags: <defaults>
</compile_context>

<pallas_src>
import jax
import jax.numpy as jnp
from jax import lax
from jax.experimental import pallas as pl
from jax.experimental.pallas import tpu as pltpu


# ------------------------------ fused kernel --------------------------------

def _make_fused_kernel(tb, t_real, hidden, need_mask):
    """Build a kernel processing `tb` timesteps per grid iteration."""
    H = hidden

    def kernel(x_ref, w_ih_ref, w_hh_ref, b_ref, h0_ref, c0_ref,
               out_ref, hy_ref, cy_ref,
               h_sc, c_sc, gx_sc):
        blk = pl.program_id(0)

        @pl.when(blk == 0)
        def _init():
            h_sc[...] = h0_ref[...].astype(jnp.float32)
            c_sc[...] = c0_ref[...].astype(jnp.float32)

        # ---- fused input projection for this block (no sequential dep) -----
        # (TB, I) x (I, 4H) on the MXU, f32 accumulation, fused bias.
        gx_sc[...] = (
            jnp.dot(x_ref[...].astype(w_ih_ref.dtype), w_ih_ref[...],
                    preferred_element_type=jnp.float32)
            + b_ref[...].astype(jnp.float32))

        w_hh = w_hh_ref[...]                          # (H, 4H) resident weight

        # ---- sequential recurrence over this block's timesteps --------------
        def step(i, carry):
            h, c = carry                              # (1, H) f32 vreg carries
            gates = gx_sc[pl.ds(i, 1), :] + jnp.dot(
                h.astype(w_hh.dtype), w_hh, preferred_element_type=jnp.float32)
            # Full-width transcendentals (2 EUP issues), then cheap lane
            # slices.  PyTorch chunk order: ingate, forgetgate, cellgate, out.
            sg = jax.nn.sigmoid(gates)
            th = jnp.tanh(gates)
            ingate     = sg[:, 0 * H:1 * H]
            forgetgate = sg[:, 1 * H:2 * H]
            cellgate   = th[:, 2 * H:3 * H]
            outgate    = sg[:, 3 * H:4 * H]
            c_new = forgetgate * c + ingate * cellgate
            h_new = outgate * jnp.tanh(c_new)
            if need_mask:
                # Padded tail steps (global t >= T) must not advance the state.
                valid = (blk * tb + i) < t_real
                h_new = jnp.where(valid, h_new, h)
                c_new = jnp.where(valid, c_new, c)
            # Stream this step's hidden state straight into the output block.
            out_ref[pl.ds(i, 1), :] = h_new.astype(out_ref.dtype)
            return h_new, c_new

        h, c = lax.fori_loop(0, tb, step, (h_sc[...], c_sc[...]), unroll=True)
        h_sc[...] = h
        c_sc[...] = c

        # hy/cy use constant-index_map output blocks: the block stays resident
        # in VMEM across the sequential ("arbitrary") grid axis and is written
        # back to HBM once; only the last iteration fills in the final state.
        # (Do not change these out_specs to non-constant index maps.)
        @pl.when(blk == pl.num_programs(0) - 1)
        def _finalize():
            hy_ref[...] = h.astype(hy_ref.dtype)
            cy_ref[...] = c.astype(cy_ref.dtype)

    return kernel


# -------------------------------- wrapper ------------------------------------

def _physical_vmem_bytes():
    try:
        return int(pltpu.get_tpu_info().vmem_capacity_bytes)
    except Exception:
        return 64 << 20   # conservative: v7x per-TensorCore VMEM


def _vmem_limit(nbytes):
    # ~2x the estimated resident footprint + 4 MiB headroom, clamped to the
    # physical VMEM of the current generation minus 16 MiB headroom.
    cap = _physical_vmem_bytes() - (16 << 20)
    want = 2 * int(nbytes) + (4 << 20)
    return int(min(max(want, 16 << 20), cap))


def lstm_forward(x, w_ih, w_hh, b_ih, b_hh, hx, cx, *,
                 block_t=32, weight_dtype=jnp.bfloat16):
    """x: (T, 1, I); weights in PyTorch layout (4H, in); hx/cx: (1, H).

    weight_dtype: dtype for the resident W_ih^T / W_hh^T (default bfloat16 —
    native MXU input on every TPU generation, halves weight VMEM).  The matmul
    inputs (x and h) are cast to this dtype too; accumulation and gate math
    stay float32.  Pass jnp.float32 for bit-faithful f32 numerics.
    """
    T, B, I = x.shape
    assert B == 1, "module's hx.reshape((1,-1)) implies batch=1"
    H = hx.shape[-1]
    G = 4 * H
    dtype = x.dtype

    wd = jnp.dtype(weight_dtype) if weight_dtype is not None else jnp.dtype(dtype)
    w_ih_t = w_ih.T.astype(wd)                      # (I, 4H)
    w_hh_t = w_hh.T.astype(wd)                      # (H, 4H)
    b = (b_ih + b_hh).reshape(1, G).astype(jnp.float32)

    # Timesteps per grid step.  Single block => block equals the full time dim
    # (no (8,128) constraint); multi-block => block must be a multiple of 8.
    if block_t >= T:
        TB, T_pad = T, T
    else:
        TB = max(8, (block_t // 8) * 8)
        T_pad = ((T + TB - 1) // TB) * TB
    n_blk = T_pad // TB
    need_mask = T_pad != T

    x2d = x.reshape(T, I)
    if need_mask:
        x2d = jnp.pad(x2d, ((0, T_pad - T), (0, 0)))

    wi = jnp.dtype(wd).itemsize
    di = jnp.dtype(dtype).itemsize
    resident = (w_ih_t.size + w_hh_t.size) * wi + G * 4 + 4 * H * di
    streamed = 2 * TB * I * di + 2 * TB * H * di      # x / out double-buffered
    scratch = TB * G * 4 + 2 * H * 4
    vmem_bytes = resident + streamed + scratch

    kernel = _make_fused_kernel(TB, T, H, need_mask)
    out_seq, hy, cy = pl.pallas_call(
        kernel,
        out_shape=(
            jax.ShapeDtypeStruct((T_pad, H), dtype),   # per-step hidden states
            jax.ShapeDtypeStruct((1, H), dtype),       # final hy
            jax.ShapeDtypeStruct((1, H), dtype),       # final cy
        ),
        grid_spec=pltpu.PrefetchScalarGridSpec(
            num_scalar_prefetch=0,
            grid=(n_blk,),
            in_specs=[
                pl.BlockSpec((TB, I), lambda t: (t, 0)),           # x rows (pipelined)
                pl.BlockSpec((I, G), lambda t: (0, 0),
                             pipeline_mode=pl.Buffered(1)),        # W_ih^T resident
                pl.BlockSpec((H, G), lambda t: (0, 0),
                             pipeline_mode=pl.Buffered(1)),        # W_hh^T resident
                pl.BlockSpec((1, G), lambda t: (0, 0),
                             pipeline_mode=pl.Buffered(1)),        # fused bias
                pl.BlockSpec((1, H), lambda t: (0, 0),
                             pipeline_mode=pl.Buffered(1)),        # h0 (blk==0 only)
                pl.BlockSpec((1, H), lambda t: (0, 0),
                             pipeline_mode=pl.Buffered(1)),        # c0 (blk==0 only)
            ],
            out_specs=[
                pl.BlockSpec((TB, H), lambda t: (t, 0)),
                pl.BlockSpec((1, H), lambda t: (0, 0)),
                pl.BlockSpec((1, H), lambda t: (0, 0)),
            ],
            scratch_shapes=[
                pltpu.VMEM((1, H), jnp.float32),    # h carry
                pltpu.VMEM((1, H), jnp.float32),    # c carry
                pltpu.VMEM((TB, G), jnp.float32),   # per-block gates_x
            ],
        ),
        compiler_params=pltpu.CompilerParams(
            dimension_semantics=("arbitrary",),     # strictly sequential in time
            vmem_limit_bytes=_vmem_limit(vmem_bytes)),
    )(x2d, w_ih_t, w_hh_t, b, hx, cx)

    # Module returns output.view(-1, hidden_size) and the final (hy, cy).
    return out_seq[:T], (hy, cy)


def lstm_ref(x, w_ih, w_hh, b_ih, b_hh, hx, cx):
    """Pure-JAX reference matching the PyTorch forward (eval mode)."""
    H = hx.shape[-1]

    def step(carry, xt):
        h, c = carry
        gates = xt @ w_ih.T + b_ih + h @ w_hh.T + b_hh
        i, f, g, o = jnp.split(gates, 4, axis=-1)
        c = jax.nn.sigmoid(f) * c + jax.nn.sigmoid(i) * jnp.tanh(g)
        h = jax.nn.sigmoid(o) * jnp.tanh(c)
        return (h, c), h

    (hT, cT), ys = jax.lax.scan(step, (hx, cx), x)
    return ys.reshape(-1, H), (hT, cT)


if __name__ == "__main__":
    def run_case(T, I, H, block_t, seed, weight_dtype, atol, rtol):
        key = jax.random.PRNGKey(seed)
        k = jax.random.split(key, 7)
        scale_i = 1.0 / (I ** 0.5)
        scale_h = 1.0 / (H ** 0.5)

        x    = jax.random.normal(k[0], (T, 1, I), jnp.float32)
        w_ih = jax.random.uniform(k[1], (4 * H, I), jnp.float32, -scale_i, scale_i)
        b_ih = jax.random.uniform(k[2], (4 * H,),   jnp.float32, -scale_i, scale_i)
        w_hh = jax.random.uniform(k[3], (4 * H, H), jnp.float32, -scale_h, scale_h)
        b_hh = jax.random.uniform(k[4], (4 * H,),   jnp.float32, -scale_h, scale_h)
        hx   = jax.random.normal(k[5], (1, H), jnp.float32)
        cx   = jax.random.normal(k[6], (1, H), jnp.float32)

        out, (hy, cy) = lstm_forward(x, w_ih, w_hh, b_ih, b_hh, hx, cx,
                                     block_t=block_t, weight_dtype=weight_dtype)
        jax.block_until_ready((out, hy, cy))

        ref_out, (ref_hy, ref_cy) = lstm_ref(x, w_ih, w_hh, b_ih, b_hh, hx, cx)
        assert out.shape == (T, H)
        assert jnp.allclose(out, ref_out, atol=atol, rtol=rtol)
        assert jnp.allclose(hy, ref_hy, atol=atol, rtol=rtol)
        assert jnp.allclose(cy, ref_cy, atol=atol, rtol=rtol)

    # Primary config (seq=8, batch=1, input=16, hidden=32), exact f32 path.
    run_case(T=8, I=16, H=32, block_t=32, seed=0,
             weight_dtype=jnp.float32, atol=1e-5, rtol=1e-5)
    # Ragged config: multi-block recurrence + padded-tail masking, exact f32.
    run_case(T=13, I=16, H=32, block_t=8, seed=1,
             weight_dtype=jnp.float32, atol=1e-5, rtol=1e-5)
    # Default bf16-weight path (loose tolerance vs. f32 reference).
    run_case(T=13, I=16, H=32, block_t=8, seed=2,
             weight_dtype=None if False else jnp.bfloat16, atol=1e-1, rtol=1e-1)

    print("KERNEL_OK")
</pallas_src>

<mosaic_0001>
module attributes {stable_mosaic.version = 11 : i64} {
  func.func @kernel(%arg0: i32, %arg1: memref<8x16xf32, #tpu.memory_space<vmem>>, %arg2: memref<16x128xf32, #tpu.memory_space<vmem>>, %arg3: memref<32x128xf32, #tpu.memory_space<vmem>>, %arg4: memref<1x128xf32, #tpu.memory_space<vmem>>, %arg5: memref<1x32xf32, #tpu.memory_space<vmem>>, %arg6: memref<1x32xf32, #tpu.memory_space<vmem>>, %arg7: memref<8x32xf32, #tpu.memory_space<vmem>>, %arg8: memref<1x32xf32, #tpu.memory_space<vmem>>, %arg9: memref<1x32xf32, #tpu.memory_space<vmem>>, %arg10: memref<1x32xf32, #tpu.memory_space<vmem>>, %arg11: memref<1x32xf32, #tpu.memory_space<vmem>>, %arg12: memref<8x128xf32, #tpu.memory_space<vmem>>) attributes {dimension_semantics = [#tpu.dimension_semantics<arbitrary>], iteration_bounds = array<i64: 1>, scalar_prefetch = 0 : i64, scratch_operands = 3 : i64, tpu.core_type = #tpu.core_type<tc>, window_params = [{transform_indices = @transform_0, window_bounds = array<i64: 8, 16>}, {pipeline_mode = #tpu.pipeline_mode<synchronous>, transform_indices = @transform_1, window_bounds = array<i64: 16, 128>}, {pipeline_mode = #tpu.pipeline_mode<synchronous>, transform_indices = @transform_2, window_bounds = array<i64: 32, 128>}, {pipeline_mode = #tpu.pipeline_mode<synchronous>, transform_indices = @transform_3, window_bounds = array<i64: 1, 128>}, {pipeline_mode = #tpu.pipeline_mode<synchronous>, transform_indices = @transform_4, window_bounds = array<i64: 1, 32>}, {pipeline_mode = #tpu.pipeline_mode<synchronous>, transform_indices = @transform_5, window_bounds = array<i64: 1, 32>}, {transform_indices = @transform_6, window_bounds = array<i64: 8, 32>}, {pipeline_mode = #tpu.pipeline_mode<synchronous>, transform_indices = @transform_7, window_bounds = array<i64: 1, 32>}, {pipeline_mode = #tpu.pipeline_mode<synchronous>, transform_indices = @transform_8, window_bounds = array<i64: 1, 32>}]} {
    %c0_i32 = arith.constant 0 : i32
    %0 = arith.cmpi eq, %arg0, %c0_i32 : i32
    %1 = arith.extui %0 : i1 to i32
    %c0_i32_0 = arith.constant 0 : i32
    %2 = arith.cmpi ne, %1, %c0_i32_0 : i32
    scf.if %2 {
      %c0_53 = arith.constant 0 : index
      %c0_54 = arith.constant 0 : index
      %186 = vector.load %arg5[%c0_53, %c0_54] : memref<1x32xf32, #tpu.memory_space<vmem>>, vector<1x32xf32>
      %c0_55 = arith.constant 0 : index
      %c0_56 = arith.constant 0 : index
      %187 = vector.load %arg10[%c0_55, %c0_56] : memref<1x32xf32, #tpu.memory_space<vmem>>, vector<1x32xf32>
      tpu.vector_store %arg10[%c0_55, %c0_56], %186 {strides = array<i32>} : memref<1x32xf32, #tpu.memory_space<vmem>>, vector<1x32xf32>,
      %c0_57 = arith.constant 0 : index
      %c0_58 = arith.constant 0 : index
      %188 = vector.load %arg6[%c0_57, %c0_58] : memref<1x32xf32, #tpu.memory_space<vmem>>, vector<1x32xf32>
      %c0_59 = arith.constant 0 : index
      %c0_60 = arith.constant 0 : index
      %189 = vector.load %arg11[%c0_59, %c0_60] : memref<1x32xf32, #tpu.memory_space<vmem>>, vector<1x32xf32>
      tpu.vector_store %arg11[%c0_59, %c0_60], %188 {strides = array<i32>} : memref<1x32xf32, #tpu.memory_space<vmem>>, vector<1x32xf32>,
    } else {
    }
    %c0 = arith.constant 0 : index
    %c0_1 = arith.constant 0 : index
    %3 = vector.load %arg1[%c0, %c0_1] : memref<8x16xf32, #tpu.memory_space<vmem>>, vector<8x16xf32>
    %c0_2 = arith.constant 0 : index
    %c0_3 = arith.constant 0 : index
    %4 = vector.load %arg2[%c0_2, %c0_3] : memref<16x128xf32, #tpu.memory_space<vmem>>, vector<16x128xf32>
    %cst = arith.constant dense<0.000000e+00> : vector<8x128xf32>
    %5 = tpu.matmul %3, %4, %cst {dimension_numbers = #tpu.dot_dimension_numbers<[1], [0], [0], [1], [0, 0, 1, 1], [], []>} : vector<8x16xf32>, vector<16x128xf32>, vector<8x128xf32> -> vector<8x128xf32>
    %c0_4 = arith.constant 0 : index
    %c0_5 = arith.constant 0 : index
    %6 = vector.load %arg4[%c0_4, %c0_5] : memref<1x128xf32, #tpu.memory_space<vmem>>, vector<1x128xf32>
    %7 = vector.broadcast %6 : vector<1x128xf32> to vector<8x128xf32>
    %8 = arith.addf %5, %7 : vector<8x128xf32>
    %c0_6 = arith.constant 0 : index
    %c0_7 = arith.constant 0 : index
    %9 = vector.load %arg12[%c0_6, %c0_7] : memref<8x128xf32, #tpu.memory_space<vmem>>, vector<8x128xf32>
    tpu.vector_store %arg12[%c0_6, %c0_7], %8 {strides = array<i32>} : memref<8x128xf32, #tpu.memory_space<vmem>>, vector<8x128xf32>,
    %c0_8 = arith.constant 0 : index
    %c0_9 = arith.constant 0 : index
    %10 = vector.load %arg3[%c0_8, %c0_9] : memref<32x128xf32, #tpu.memory_space<vmem>>, vector<32x128xf32>
    %c0_10 = arith.constant 0 : index
    %c0_11 = arith.constant 0 : index
    %11 = vector.load %arg10[%c0_10, %c0_11] : memref<1x32xf32, #tpu.memory_space<vmem>>, vector<1x32xf32>
    %c0_12 = arith.constant 0 : index
    %c0_13 = arith.constant 0 : index
    %12 = vector.load %arg11[%c0_12, %c0_13] : memref<1x32xf32, #tpu.memory_space<vmem>>, vector<1x32xf32>
    %c0_i32_14 = arith.constant 0 : i32
    %13 = arith.index_cast %c0_i32_14 : i32 to index
    %c0_15 = arith.constant 0 : index
    %14 = vector.load %arg12[%13, %c0_15] : memref<8x128xf32, #tpu.memory_space<vmem>>, vector<1x128xf32>
    %cst_16 = arith.constant dense<0.000000e+00> : vector<1x128xf32>
    %15 = tpu.matmul %11, %10, %cst_16 {dimension_numbers = #tpu.dot_dimension_numbers<[1], [0], [0], [1], [0, 0, 1, 1], [], []>} : vector<1x32xf32>, vector<32x128xf32>, vector<1x128xf32> -> vector<1x128xf32>
    %16 = arith.addf %14, %15 : vector<1x128xf32>
    %17 = arith.negf %16 : vector<1x128xf32>
    %18 = math.exp %17 : vector<1x128xf32>
    %cst_17 = arith.constant 1.000000e+00 : f32
    %19 = vector.broadcast %cst_17 : f32 to vector<1x128xf32>
    %20 = arith.addf %19, %18 : vector<1x128xf32>
    %21 = arith.divf %19, %20 : vector<1x128xf32>
    %22 = math.tanh %16 : vector<1x128xf32>
    %23 = vector.extract_strided_slice %21 {offsets = [0, 0], sizes = [1, 32], strides = [1, 1]} : vector<1x128xf32> to vector<1x32xf32>
    %24 = vector.extract_strided_slice %21 {offsets = [0, 32], sizes = [1, 32], strides = [1, 1]} : vector<1x128xf32> to vector<1x32xf32>
    %25 = vector.extract_strided_slice %22 {offsets = [0, 64], sizes = [1, 32], strides = [1, 1]} : vector<1x128xf32> to vector<1x32xf32>
    %26 = vector.extract_strided_slice %21 {offsets = [0, 96], sizes = [1, 32], strides = [1, 1]} : vector<1x128xf32> to vector<1x32xf32>
    %27 = arith.mulf %24, %12 : vector<1x32xf32>
    %28 = arith.mulf %23, %25 : vector<1x32xf32>
    %29 = arith.addf %27, %28 : vector<1x32xf32>
    %30 = math.tanh %29 : vector<1x32xf32>
    %31 = arith.mulf %26, %30 : vector<1x32xf32>
    %32 = arith.index_cast %c0_i32_14 : i32 to index
    %c0_18 = arith.constant 0 : index
    %33 = vector.load %arg7[%32, %c0_18] : memref<8x32xf32, #tpu.memory_space<vmem>>, vector<1x32xf32>
    tpu.vector_store %arg7[%32, %c0_18], %31 {strides = array<i32>} : memref<8x32xf32, #tpu.memory_space<vmem>>, vector<1x32xf32>,
    %c1_i32 = arith.constant 1 : i32
    %34 = arith.index_cast %c1_i32 : i32 to index
    %c0_19 = arith.constant 0 : index
    %35 = vector.load %arg12[%34, %c0_19] : memref<8x128xf32, #tpu.memory_space<vmem>>, vector<1x128xf32>
    %cst_20 = arith.constant dense<0.000000e+00> : vector<1x128xf32>
    %36 = tpu.matmul %31, %10, %cst_20 {dimension_numbers = #tpu.dot_dimension_numbers<[1], [0], [0], [1], [0, 0, 1, 1], [], []>} : vector<1x32xf32>, vector<32x128xf32>, vector<1x128xf32> -> vector<1x128xf32>
    %37 = arith.addf %35, %36 : vector<1x128xf32>
    %38 = arith.negf %37 : vector<1x128xf32>
    %39 = math.exp %38 : vector<1x128xf32>
    %cst_21 = arith.constant 1.000000e+00 : f32
    %40 = vector.broadcast %cst_21 : f32 to vector<1x128xf32>
    %41 = arith.addf %40, %39 : vector<1x128xf32>
    %42 = arith.divf %40, %41 : vector<1x128xf32>
    %43 = math.tanh %37 : vector<1x128xf32>
    %44 = vector.extract_strided_slice %42 {offsets = [0, 0], sizes = [1, 32], strides = [1, 1]} : vector<1x128xf32> to vector<1x32xf32>
    %45 = vector.extract_strided_slice %42 {offsets = [0, 32], sizes = [1, 32], strides = [1, 1]} : vector<1x128xf32> to vector<1x32xf32>
    %46 = vector.extract_strided_slice %43 {offsets = [0, 64], sizes = [1, 32], strides = [1, 1]} : vector<1x128xf32> to vector<1x32xf32>
    %47 = vector.extract_strided_slice %42 {offsets = [0, 96], sizes = [1, 32], strides = [1, 1]} : vector<1x128xf32> to vector<1x32xf32>
    %48 = arith.mulf %45, %29 : vector<1x32xf32>
    %49 = arith.mulf %44, %46 : vector<1x32xf32>
    %50 = arith.addf %48, %49 : vector<1x32xf32>
    %51 = math.tanh %50 : vector<1x32xf32>
    %52 = arith.mulf %47, %51 : vector<1x32xf32>
    %53 = arith.index_cast %c1_i32 : i32 to index
    %c0_22 = arith.constant 0 : index
    %54 = vector.load %arg7[%53, %c0_22] : memref<8x32xf32, #tpu.memory_space<vmem>>, vector<1x32xf32>
    tpu.vector_store %arg7[%53, %c0_22], %52 {strides = array<i32>} : memref<8x32xf32, #tpu.memory_space<vmem>>, vector<1x32xf32>,
    %c2_i32 = arith.constant 2 : i32
    %55 = arith.index_cast %c2_i32 : i32 to index
    %c0_23 = arith.constant 0 : index
    %56 = vector.load %arg12[%55, %c0_23] : memref<8x128xf32, #tpu.memory_space<vmem>>, vector<1x128xf32>
    %cst_24 = arith.constant dense<0.000000e+00> : vector<1x128xf32>
    %57 = tpu.matmul %52, %10, %cst_24 {dimension_numbers = #tpu.dot_dimension_numbers<[1], [0], [0], [1], [0, 0, 1, 1], [], []>} : vector<1x32xf32>, vector<32x128xf32>, vector<1x128xf32> -> vector<1x128xf32>
    %58 = arith.addf %56, %57 : vector<1x128xf32>
    %59 = arith.negf %58 : vector<1x128xf32>
    %60 = math.exp %59 : vector<1x128xf32>
    %cst_25 = arith.constant 1.000000e+00 : f32
    %61 = vector.broadcast %cst_25 : f32 to vector<1x128xf32>
    %62 = arith.addf %61, %60 : vector<1x128xf32>
    %63 = arith.divf %61, %62 : vector<1x128xf32>
    %64 = math.tanh %58 : vector<1x128xf32>
    %65 = vector.extract_strided_slice %63 {offsets = [0, 0], sizes = [1, 32], strides = [1, 1]} : vector<1x128xf32> to vector<1x32xf32>
    %66 = vector.extract_strided_slice %63 {offsets = [0, 32], sizes = [1, 32], strides = [1, 1]} : vector<1x128xf32> to vector<1x32xf32>
    %67 = vector.extract_strided_slice %64 {offsets = [0, 64], sizes = [1, 32], strides = [1, 1]} : vector<1x128xf32> to vector<1x32xf32>
    %68 = vector.extract_strided_slice %63 {offsets = [0, 96], sizes = [1, 32], strides = [1, 1]} : vector<1x128xf32> to vector<1x32xf32>
    %69 = arith.mulf %66, %50 : vector<1x32xf32>
    %70 = arith.mulf %65, %67 : vector<1x32xf32>
    %71 = arith.addf %69, %70 : vector<1x32xf32>
    %72 = math.tanh %71 : vector<1x32xf32>
    %73 = arith.mulf %68, %72 : vector<1x32xf32>
    %74 = arith.index_cast %c2_i32 : i32 to index
    %c0_26 = arith.constant 0 : index
    %75 = vector.load %arg7[%74, %c0_26] : memref<8x32xf32, #tpu.memory_space<vmem>>, vector<1x32xf32>
    tpu.vector_store %arg7[%74, %c0_26], %73 {strides = array<i32>} : memref<8x32xf32, #tpu.memory_space<vmem>>, vector<1x32xf32>,
    %c3_i32 = arith.constant 3 : i32
    %76 = arith.index_cast %c3_i32 : i32 to index
    %c0_27 = arith.constant 0 : index
    %77 = vector.load %arg12[%76, %c0_27] : memref<8x128xf32, #tpu.memory_space<vmem>>, vector<1x128xf32>
    %cst_28 = arith.constant dense<0.000000e+00> : vector<1x128xf32>
    %78 = tpu.matmul %73, %10, %cst_28 {dimension_numbers = #tpu.dot_dimension_numbers<[1], [0], [0], [1], [0, 0, 1, 1], [], []>} : vector<1x32xf32>, vector<32x128xf32>, vector<1x128xf32> -> vector<1x128xf32>
    %79 = arith.addf %77, %78 : vector<1x128xf32>
    %80 = arith.negf %79 : vector<1x128xf32>
    %81 = math.exp %80 : vector<1x128xf32>
    %cst_29 = arith.constant 1.000000e+00 : f32
    %82 = vector.broadcast %cst_29 : f32 to vector<1x128xf32>
    %83 = arith.addf %82, %81 : vector<1x128xf32>
    %84 = arith.divf %82, %83 : vector<1x128xf32>
    %85 = math.tanh %79 : vector<1x128xf32>
    %86 = vector.extract_strided_slice %84 {offsets = [0, 0], sizes = [1, 32], strides = [1, 1]} : vector<1x128xf32> to vector<1x32xf32>
    %87 = vector.extract_strided_slice %84 {offsets = [0, 32], sizes = [1, 32], strides = [1, 1]} : vector<1x128xf32> to vector<1x32xf32>
    %88 = vector.extract_strided_slice %85 {offsets = [0, 64], sizes = [1, 32], strides = [1, 1]} : vector<1x128xf32> to vector<1x32xf32>
    %89 = vector.extract_strided_slice %84 {offsets = [0, 96], sizes = [1, 32], strides = [1, 1]} : vector<1x128xf32> to vector<1x32xf32>
    %90 = arith.mulf %87, %71 : vector<1x32xf32>
    %91 = arith.mulf %86, %88 : vector<1x32xf32>
    %92 = arith.addf %90, %91 : vector<1x32xf32>
    %93 = math.tanh %92 : vector<1x32xf32>
    %94 = arith.mulf %89, %93 : vector<1x32xf32>
    %95 = arith.index_cast %c3_i32 : i32 to index
    %c0_30 = arith.constant 0 : index
    %96 = vector.load %arg7[%95, %c0_30] : memref<8x32xf32, #tpu.memory_space<vmem>>, vector<1x32xf32>
    tpu.vector_store %arg7[%95, %c0_30], %94 {strides = array<i32>} : memref<8x32xf32, #tpu.memory_space<vmem>>, vector<1x32xf32>,
    %c4_i32 = arith.constant 4 : i32
    %97 = arith.index_cast %c4_i32 : i32 to index
    %c0_31 = arith.constant 0 : index
    %98 = vector.load %arg12[%97, %c0_31] : memref<8x128xf32, #tpu.memory_space<vmem>>, vector<1x128xf32>
    %cst_32 = arith.constant dense<0.000000e+00> : vector<1x128xf32>
    %99 = tpu.matmul %94, %10, %cst_32 {dimension_numbers = #tpu.dot_dimension_numbers<[1], [0], [0], [1], [0, 0, 1, 1], [], []>} : vector<1x32xf32>, vector<32x128xf32>, vector<1x128xf32> -> vector<1x128xf32>
    %100 = arith.addf %98, %99 : vector<1x128xf32>
    %101 = arith.negf %100 : vector<1x128xf32>
    %102 = math.exp %101 : vector<1x128xf32>
    %cst_33 = arith.constant 1.000000e+00 : f32
    %103 = vector.broadcast %cst_33 : f32 to vector<1x128xf32>
    %104 = arith.addf %103, %102 : vector<1x128xf32>
    %105 = arith.divf %103, %104 : vector<1x128xf32>
    %106 = math.tanh %100 : vector<1x128xf32>
    %107 = vector.extract_strided_slice %105 {offsets = [0, 0], sizes = [1, 32], strides = [1, 1]} : vector<1x128xf32> to vector<1x32xf32>
    %108 = vector.extract_strided_slice %105 {offsets = [0, 32], sizes = [1, 32], strides = [1, 1]} : vector<1x128xf32> to vector<1x32xf32>
    %109 = vector.extract_strided_slice %106 {offsets = [0, 64], sizes = [1, 32], strides = [1, 1]} : vector<1x128xf32> to vector<1x32xf32>
    %110 = vector.extract_strided_slice %105 {offsets = [0, 96], sizes = [1, 32], strides = [1, 1]} : vector<1x128xf32> to vector<1x32xf32>
    %111 = arith.mulf %108, %92 : vector<1x32xf32>
    %112 = arith.mulf %107, %109 : vector<1x32xf32>
    %113 = arith.addf %111, %112 : vector<1x32xf32>
    %114 = math.tanh %113 : vector<1x32xf32>
    %115 = arith.mulf %110, %114 : vector<1x32xf32>
    %116 = arith.index_cast %c4_i32 : i32 to index
    %c0_34 = arith.constant 0 : index
    %117 = vector.load %arg7[%116, %c0_34] : memref<8x32xf32, #tpu.memory_space<vmem>>, vector<1x32xf32>
    tpu.vector_store %arg7[%116, %c0_34], %115 {strides = array<i32>} : memref<8x32xf32, #tpu.memory_space<vmem>>, vector<1x32xf32>,
    %c5_i32 = arith.constant 5 : i32
    %118 = arith.index_cast %c5_i32 : i32 to index
    %c0_35 = arith.constant 0 : index
    %119 = vector.load %arg12[%118, %c0_35] : memref<8x128xf32, #tpu.memory_space<vmem>>, vector<1x128xf32>
    %cst_36 = arith.constant dense<0.000000e+00> : vector<1x128xf32>
    %120 = tpu.matmul %115, %10, %cst_36 {dimension_numbers = #tpu.dot_dimension_numbers<[1], [0], [0], [1], [0, 0, 1, 1], [], []>} : vector<1x32xf32>, vector<32x128xf32>, vector<1x128xf32> -> vector<1x128xf32>
    %121 = arith.addf %119, %120 : vector<1x128xf32>
    %122 = arith.negf %121 : vector<1x128xf32>
    %123 = math.exp %122 : vector<1x128xf32>
    %cst_37 = arith.constant 1.000000e+00 : f32
    %124 = vector.broadcast %cst_37 : f32 to vector<1x128xf32>
    %125 = arith.addf %124, %123 : vector<1x128xf32>
    %126 = arith.divf %124, %125 : vector<1x128xf32>
    %127 = math.tanh %121 : vector<1x128xf32>
    %128 = vector.extract_strided_slice %126 {offsets = [0, 0], sizes = [1, 32], strides = [1, 1]} : vector<1x128xf32> to vector<1x32xf32>
    %129 = vector.extract_strided_slice %126 {offsets = [0, 32], sizes = [1, 32], strides = [1, 1]} : vector<1x128xf32> to vector<1x32xf32>
    %130 = vector.extract_strided_slice %127 {offsets = [0, 64], sizes = [1, 32], strides = [1, 1]} : vector<1x128xf32> to vector<1x32xf32>
    %131 = vector.extract_strided_slice %126 {offsets = [0, 96], sizes = [1, 32], strides = [1, 1]} : vector<1x128xf32> to vector<1x32xf32>
    %132 = arith.mulf %129, %113 : vector<1x32xf32>
    %133 = arith.mulf %128, %130 : vector<1x32xf32>
    %134 = arith.addf %132, %133 : vector<1x32xf32>
    %135 = math.tanh %134 : vector<1x32xf32>
    %136 = arith.mulf %131, %135 : vector<1x32xf32>
    %137 = arith.index_cast %c5_i32 : i32 to index
    %c0_38 = arith.constant 0 : index
    %138 = vector.load %arg7[%137, %c0_38] : memref<8x32xf32, #tpu.memory_space<vmem>>, vector<1x32xf32>
    tpu.vector_store %arg7[%137, %c0_38], %136 {strides = array<i32>} : memref<8x32xf32, #tpu.memory_space<vmem>>, vector<1x32xf32>,
    %c6_i32 = arith.constant 6 : i32
    %139 = arith.index_cast %c6_i32 : i32 to index
    %c0_39 = arith.constant 0 : index
    %140 = vector.load %arg12[%139, %c0_39] : memref<8x128xf32, #tpu.memory_space<vmem>>, vector<1x128xf32>
    %cst_40 = arith.constant dense<0.000000e+00> : vector<1x128xf32>
    %141 = tpu.matmul %136, %10, %cst_40 {dimension_numbers = #tpu.dot_dimension_numbers<[1], [0], [0], [1], [0, 0, 1, 1], [], []>} : vector<1x32xf32>, vector<32x128xf32>, vector<1x128xf32> -> vector<1x128xf32>
    %142 = arith.addf %140, %141 : vector<1x128xf32>
    %143 = arith.negf %142 : vector<1x128xf32>
    %144 = math.exp %143 : vector<1x128xf32>
    %cst_41 = arith.constant 1.000000e+00 : f32
    %145 = vector.broadcast %cst_41 : f32 to vector<1x128xf32>
    %146 = arith.addf %145, %144 : vector<1x128xf32>
    %147 = arith.divf %145, %146 : vector<1x128xf32>
    %148 = math.tanh %142 : vector<1x128xf32>
    %149 = vector.extract_strided_slice %147 {offsets = [0, 0], sizes = [1, 32], strides = [1, 1]} : vector<1x128xf32> to vector<1x32xf32>
    %150 = vector.extract_strided_slice %147 {offsets = [0, 32], sizes = [1, 32], strides = [1, 1]} : vector<1x128xf32> to vector<1x32xf32>
    %151 = vector.extract_strided_slice %148 {offsets = [0, 64], sizes = [1, 32], strides = [1, 1]} : vector<1x128xf32> to vector<1x32xf32>
    %152 = vector.extract_strided_slice %147 {offsets = [0, 96], sizes = [1, 32], strides = [1, 1]} : vector<1x128xf32> to vector<1x32xf32>
    %153 = arith.mulf %150, %134 : vector<1x32xf32>
    %154 = arith.mulf %149, %151 : vector<1x32xf32>
    %155 = arith.addf %153, %154 : vector<1x32xf32>
    %156 = math.tanh %155 : vector<1x32xf32>
    %157 = arith.mulf %152, %156 : vector<1x32xf32>
    %158 = arith.index_cast %c6_i32 : i32 to index
    %c0_42 = arith.constant 0 : index
    %159 = vector.load %arg7[%158, %c0_42] : memref<8x32xf32, #tpu.memory_space<vmem>>, vector<1x32xf32>
    tpu.vector_store %arg7[%158, %c0_42], %157 {strides = array<i32>} : memref<8x32xf32, #tpu.memory_space<vmem>>, vector<1x32xf32>,
    %c7_i32 = arith.constant 7 : i32
    %160 = arith.index_cast %c7_i32 : i32 to index
    %c0_43 = arith.constant 0 : index
    %161 = vector.load %arg12[%160, %c0_43] : memref<8x128xf32, #tpu.memory_space<vmem>>, vector<1x128xf32>
    %cst_44 = arith.constant dense<0.000000e+00> : vector<1x128xf32>
    %162 = tpu.matmul %157, %10, %cst_44 {dimension_numbers = #tpu.dot_dimension_numbers<[1], [0], [0], [1], [0, 0, 1, 1], [], []>} : vector<1x32xf32>, vector<32x128xf32>, vector<1x128xf32> -> vector<1x128xf32>
    %163 = arith.addf %161, %162 : vector<1x128xf32>
    %164 = arith.negf %163 : vector<1x128xf32>
    %165 = math.exp %164 : vector<1x128xf32>
    %cst_45 = arith.constant 1.000000e+00 : f32
    %166 = vector.broadcast %cst_45 : f32 to vector<1x128xf32>
    %167 = arith.addf %166, %165 : vector<1x128xf32>
    %168 = arith.divf %166, %167 : vector<1x128xf32>
    %169 = math.tanh %163 : vector<1x128xf32>
    %170 = vector.extract_strided_slice %168 {offsets = [0, 0], sizes = [1, 32], strides = [1, 1]} : vector<1x128xf32> to vector<1x32xf32>
    %171 = vector.extract_strided_slice %168 {offsets = [0, 32], sizes = [1, 32], strides = [1, 1]} : vector<1x128xf32> to vector<1x32xf32>
    %172 = vector.extract_strided_slice %169 {offsets = [0, 64], sizes = [1, 32], strides = [1, 1]} : vector<1x128xf32> to vector<1x32xf32>
    %173 = vector.extract_strided_slice %168 {offsets = [0, 96], sizes = [1, 32], strides = [1, 1]} : vector<1x128xf32> to vector<1x32xf32>
    %174 = arith.mulf %171, %155 : vector<1x32xf32>
    %175 = arith.mulf %170, %172 : vector<1x32xf32>
    %176 = arith.addf %174, %175 : vector<1x32xf32>
    %177 = math.tanh %176 : vector<1x32xf32>
    %178 = arith.mulf %173, %177 : vector<1x32xf32>
    %179 = arith.index_cast %c7_i32 : i32 to index
    %c0_46 = arith.constant 0 : index
    %180 = vector.load %arg7[%179, %c0_46] : memref<8x32xf32, #tpu.memory_space<vmem>>, vector<1x32xf32>
    tpu.vector_store %arg7[%179, %c0_46], %178 {strides = array<i32>} : memref<8x32xf32, #tpu.memory_space<vmem>>, vector<1x32xf32>,
    %c8_i32 = arith.constant 8 : i32
    %c0_47 = arith.constant 0 : index
    %c0_48 = arith.constant 0 : index
    %181 = vector.load %arg10[%c0_47, %c0_48] : memref<1x32xf32, #tpu.memory_space<vmem>>, vector<1x32xf32>
    tpu.vector_store %arg10[%c0_47, %c0_48], %178 {strides = array<i32>} : memref<1x32xf32, #tpu.memory_space<vmem>>, vector<1x32xf32>,
    %c0_49 = arith.constant 0 : index
    %c0_50 = arith.constant 0 : index
    %182 = vector.load %arg11[%c0_49, %c0_50] : memref<1x32xf32, #tpu.memory_space<vmem>>, vector<1x32xf32>
    tpu.vector_store %arg11[%c0_49, %c0_50], %176 {strides = array<i32>} : memref<1x32xf32, #tpu.memory_space<vmem>>, vector<1x32xf32>,
    %c0_i32_51 = arith.constant 0 : i32
    %183 = arith.cmpi eq, %arg0, %c0_i32_51 : i32
    %184 = arith.extui %183 : i1 to i32
    %c0_i32_52 = arith.constant 0 : i32
    %185 = arith.cmpi ne, %184, %c0_i32_52 : i32
    scf.if %185 {
      %c0_53 = arith.constant 0 : index
      %c0_54 = arith.constant 0 : index
      %186 = vector.load %arg8[%c0_53, %c0_54] : memref<1x32xf32, #tpu.memory_space<vmem>>, vector<1x32xf32>
      tpu.vector_store %arg8[%c0_53, %c0_54], %178 {strides = array<i32>} : memref<1x32xf32, #tpu.memory_space<vmem>>, vector<1x32xf32>,
      %c0_55 = arith.constant 0 : index
      %c0_56 = arith.constant 0 : index
      %187 = vector.load %arg9[%c0_55, %c0_56] : memref<1x32xf32, #tpu.memory_space<vmem>>, vector<1x32xf32>
      tpu.vector_store %arg9[%c0_55, %c0_56], %176 {strides = array<i32>} : memref<1x32xf32, #tpu.memory_space<vmem>>, vector<1x32xf32>,
    } else {
    }
    return
  }
  func.func @transform_0(%arg0: i32) -> (i32, i32) {
    %c0_i32 = arith.constant 0 : i32
    %c0_i32_0 = arith.constant 0 : i32
    return %arg0, %c0_i32 : i32, i32
  }
  func.func @transform_1(%arg0: i32) -> (i32, i32) {
    %c0_i32 = arith.constant 0 : i32
    %c0_i32_0 = arith.constant 0 : i32
    %c0_i32_1 = arith.constant 0 : i32
    return %c0_i32, %c0_i32_0 : i32, i32
  }
  func.func @transform_2(%arg0: i32) -> (i32, i32) {
    %c0_i32 = arith.constant 0 : i32
    %c0_i32_0 = arith.constant 0 : i32
    %c0_i32_1 = arith.constant 0 : i32
    return %c0_i32, %c0_i32_0 : i32, i32
  }
  func.func @transform_3(%arg0: i32) -> (i32, i32) {
    %c0_i32 = arith.constant 0 : i32
    %c0_i32_0 = arith.constant 0 : i32
    %c0_i32_1 = arith.constant 0 : i32
    return %c0_i32, %c0_i32_0 : i32, i32
  }
  func.func @transform_4(%arg0: i32) -> (i32, i32) {
    %c0_i32 = arith.constant 0 : i32
    %c0_i32_0 = arith.constant 0 : i32
    %c0_i32_1 = arith.constant 0 : i32
    return %c0_i32, %c0_i32_0 : i32, i32
  }
  func.func @transform_5(%arg0: i32) -> (i32, i32) {
    %c0_i32 = arith.constant 0 : i32
    %c0_i32_0 = arith.constant 0 : i32
    %c0_i32_1 = arith.constant 0 : i32
    return %c0_i32, %c0_i32_0 : i32, i32
  }
  func.func @transform_6(%arg0: i32) -> (i32, i32) {
    %c0_i32 = arith.constant 0 : i32
    %c0_i32_0 = arith.constant 0 : i32
    return %arg0, %c0_i32 : i32, i32
  }
  func.func @transform_7(%arg0: i32) -> (i32, i32) {
    %c0_i32 = arith.constant 0 : i32
    %c0_i32_0 = arith.constant 0 : i32
    %c0_i32_1 = arith.constant 0 : i32
    return %c0_i32, %c0_i32_0 : i32, i32
  }
  func.func @transform_8(%arg0: i32) -> (i32, i32) {
    %c0_i32 = arith.constant 0 : i32
    %c0_i32_0 = arith.constant 0 : i32
    %c0_i32_1 = arith.constant 0 : i32
    return %c0_i32, %c0_i32_0 : i32, i32
  }
}

</mosaic_0001>

<llo_original>
// kernel: tpu_custom_call.1
$region0: #{tpu_custom_call.1}
  #allocation0 [shape = 'u32[]', space=smem, size = 0x4, offset = 0x4, fixed_abs, tag = 'smem constant byte address 0x4 - core index']
  #allocation1 [shape = 'u32[72,128]{1,0:T(1,128)}', space=vmem, size = 0x9000, scoped, tag = 'internal scratch']
  #allocation2 [shape = 'f32[1,32]{1,0:T(1,128)}', space=vmem, size = 0x200, scoped, tag = 'scratch operand']
  #allocation3 [shape = 'f32[1,32]{1,0:T(1,128)}', space=vmem, size = 0x200, scoped, tag = 'scratch operand']
  #allocation4 [shape = 'f32[8,128]{1,0:T(8,128)}', space=vmem, size = 0x1000, scoped, tag = 'scratch operand']
  %s0 = inlined_call_operand.hbm [shape: f32[8,16], index: 0, kind: input, shape index: {}]
  %s1 = inlined_call_operand.hbm [shape: f32[16,128], index: 1, kind: input, shape index: {}]
  %s2 = inlined_call_operand.hbm [shape: f32[32,128], index: 2, kind: input, shape index: {}]
  %s3 = inlined_call_operand.vmem [shape: f32[1,128], index: 3, kind: input, shape index: {}]
  %s4 = inlined_call_operand.vmem [shape: f32[1,32], index: 4, kind: input, shape index: {}]
  %s5 = inlined_call_operand.vmem [shape: f32[1,32], index: 5, kind: input, shape index: {}]
  %s6 = inlined_call_operand.hbm [shape: f32[8,32], index: 6, kind: output, shape index: {0}]
  %s7 = inlined_call_operand.hbm [shape: f32[1,32], index: 7, kind: output, shape index: {1}]
  %s8 = inlined_call_operand.hbm [shape: f32[1,32], index: 8, kind: output, shape index: {2}]
  %9 = xla_tuple %s6, %s7, %s8
  %s10 = sld [smem:[#allocation0]]
  $region70: #{tpu_custom_call.1} parent=0
    _
  %s12 = ssub.s32 1, %s10
  %s13 = scalar_select 0, %s12, %s10
  $region1: #{tpu_custom_call.1} parent=0
    #allocation5 [shape = 'u8[4096]{0}', space=vmem, size = 0x1000, scoped, tag = 'input window, operand 0, single buffered']
    #allocation6 [shape = 's32[1]{0}', space=sflag, size = 0x4, scoped, tag = 'scoped memory for tpu_custom_call.1']
    #allocation7 [shape = 's32[1]{0}', space=sflag, size = 0x4, scoped, tag = 'scoped memory for tpu_custom_call.1']
    #allocation8 [shape = 'u8[8192]{0}', space=vmem, size = 0x2000, scoped, tag = 'input window, operand 1, single buffered']
    #allocation9 [shape = 's32[1]{0}', space=sflag, size = 0x4, scoped, tag = 'scoped memory for tpu_custom_call.1']
    #allocation10 [shape = 'u8[16384]{0}', space=vmem, size = 0x4000, scoped, tag = 'input window, operand 2, single buffered']
    #allocation11 [shape = 'u8[4096]{0}', space=vmem, size = 0x1000, scoped, tag = 'output window, operand 0, single buffered']
    #allocation12 [shape = 'u8[512]{0}', space=vmem, size = 0x400, scoped, tag = 'output window, operand 1, single buffered']
    #allocation13 [shape = 's32[1]{0}', space=sflag, size = 0x4, scoped, tag = 'scoped memory for tpu_custom_call.1']
    #allocation14 [shape = 'u8[512]{0}', space=vmem, size = 0x400, scoped, tag = 'output window, operand 2, single buffered']
    %14 = vsyncpa [#allocation6], 0
    %15 = vsyncpa [#allocation9], 0
    %16 = vsyncpa [#allocation7], 0
    %17 = vsyncpa [#allocation13], 0
    // Predicated region
    $region2: #{tpu_custom_call.1} parent=1 // pred_check
      _
    $region3: #{tpu_custom_call.1} parent=1 // pred_check_branch
      %19 = sbr.rel (0) target = $region5
    $region4: #{tpu_custom_call.1} parent=1 // pred_region
      %21 = vsyncadd [#allocation6], 0
      %s23 = sshll.u32 %s0, 4
      %s24 = int_to_ptr.hbm [resolvable:$true] %s23
      %s25 = sshll.u32 [#allocation5], 4
      %s26 = int_to_ptr.vmem [resolvable:$true] %s25
      %28 = dma.hbm_to_vmem [thread:$0]  %s24, 128, %s26, [#allocation6]
    $region5: #{tpu_custom_call.1} parent=1 // pred_fallthru
      _
    // Predicated region
    $region6: #{tpu_custom_call.1} parent=1 // pred_check
      _
    $region7: #{tpu_custom_call.1} parent=1 // pred_check_branch
      %30 = sbr.rel (0) target = $region9
    $region8: #{tpu_custom_call.1} parent=1 // pred_region
      %32 = vsyncadd [#allocation9], 0
      %s33 = sshll.u32 %s1, 4
      %s34 = int_to_ptr.hbm [resolvable:$true] %s33
      %s35 = sshll.u32 [#allocation8], 4
      %s36 = int_to_ptr.vmem [resolvable:$true] %s35
      %41 = dma.hbm_to_vmem [thread:$0]  %s34, 256, %s36, [#allocation9], 128, 128, 8
    $region9: #{tpu_custom_call.1} parent=1 // pred_fallthru
      _
    // Predicated region
    $region10: #{tpu_custom_call.1} parent=1 // pred_check
      _
    $region11: #{tpu_custom_call.1} parent=1 // pred_check_branch
      %43 = sbr.rel (0) target = $region13
    $region12: #{tpu_custom_call.1} parent=1 // pred_region
      %45 = vsyncadd [#allocation9], 0
      %s46 = sshll.u32 %s2, 4
      %s47 = int_to_ptr.hbm [resolvable:$true] %s46
      %s48 = sshll.u32 [#allocation10], 4
      %s49 = int_to_ptr.vmem [resolvable:$true] %s48
      %54 = dma.hbm_to_vmem [thread:$0]  %s47, 512, %s49, [#allocation9], 128, 128, 8
    $region13: #{tpu_custom_call.1} parent=1 // pred_fallthru
      _
    // Predicated region
    $region14: #{tpu_custom_call.1} parent=1 // pred_check
      _
    $region15: #{tpu_custom_call.1} parent=1 // pred_check_branch
      %56 = sbr.rel (0) target = $region17
    $region16: #{tpu_custom_call.1} parent=1 // pred_region
      _
    $region17: #{tpu_custom_call.1} parent=1 // pred_fallthru
      _
    // Predicated region
    $region18: #{tpu_custom_call.1} parent=1 // pred_check
      _
    $region19: #{tpu_custom_call.1} parent=1 // pred_check_branch
      %58 = sbr.rel (0) target = $region21
    $region20: #{tpu_custom_call.1} parent=1 // pred_region
      _
    $region21: #{tpu_custom_call.1} parent=1 // pred_fallthru
      _
    // Predicated region
    $region22: #{tpu_custom_call.1} parent=1 // pred_check
      _
    $region23: #{tpu_custom_call.1} parent=1 // pred_check_branch
      %60 = sbr.rel (0) target = $region25
    $region24: #{tpu_custom_call.1} parent=1 // pred_region
      _
    $region25: #{tpu_custom_call.1} parent=1 // pred_fallthru
      _
    // Predicated region
    $region26: #{tpu_custom_call.1} parent=1 // pred_check
      _
    $region27: #{tpu_custom_call.1} parent=1 // pred_check_branch
      %62 = sbr.rel (0) target = $region29
    $region28: #{tpu_custom_call.1} parent=1 // pred_region
      %64 = dma.done [#allocation6], 128
    $region29: #{tpu_custom_call.1} parent=1 // pred_fallthru
      _
    // Predicated region
    $region30: #{tpu_custom_call.1} parent=1 // pred_check
      _
    $region31: #{tpu_custom_call.1} parent=1 // pred_check_branch
      %66 = sbr.rel (0) target = $region33
    $region32: #{tpu_custom_call.1} parent=1 // pred_region
      %68 = dma.done [#allocation9], 256
    $region33: #{tpu_custom_call.1} parent=1 // pred_fallthru
      _
    // Predicated region
    $region34: #{tpu_custom_call.1} parent=1 // pred_check
      _
    $region35: #{tpu_custom_call.1} parent=1 // pred_check_branch
      %70 = sbr.rel (0) target = $region37
    $region36: #{tpu_custom_call.1} parent=1 // pred_region
      %72 = dma.done [#allocation9], 512
    $region37: #{tpu_custom_call.1} parent=1 // pred_fallthru
      _
    %p73 = scmp.eq.s32.totalorder 0, 0
    // Predicated region
    $region38: #{tpu_custom_call.1} parent=1 // pred_check
      %p74 = pneg %p73
    $region39: #{tpu_custom_call.1} parent=1 // pred_check_branch
      %76 = sbr.rel (%p74) target = $region41
    $region40: #{tpu_custom_call.1} parent=1 // pred_region
      %v77 = vld [vmem:[%s4] sm:$0x1]
      %vm78 = vcmask 253952
      %79 = vst.msk [vmem:[#allocation2] sm:$0x1] %vm78, %v77
      %v80 = vld [vmem:[%s5] sm:$0x1]
      %81 = vst.msk [vmem:[#allocation3] sm:$0x1] %vm78, %v80
    $region41: #{tpu_custom_call.1} parent=1 // pred_fallthru
      _
    %v82 = vld [vmem:[#allocation5] sm:$0xff]
    %v83 = vld [vmem:[#allocation8] sm:$0xff]
    %v84 = vld [vmem:[#allocation8 + $0x8] sm:$0xff]
    %v85 = vld [vmem:[%s3] sm:$0x1]
    %v87 = vperm.slane %v85, 0
    %vm89 = vcmask 130048
    %v91 = vsel %vm89, %v82, 0
    %93 = vmatpush.msra.mxu0 0.0
    %94 = vmatpush.msra.mxu0 0.0
    %95 = vmatpush.msra.mxu0 0.0
    %96 = vmatpush.msra.mxu0 0.0
    %97 = vmatpush.msra.mxu0 0.0
    %98 = vmatpush.msra.mxu0 0.0
    %99 = vmatpush.msra.mxu0 0.0
    %100 = vmatpush.msra.mxu0 0.0
    %101 = vmatpush.msra.mxu0 0.0
    %102 = vmatpush.msra.mxu0 0.0
    %103 = vmatpush.msra.mxu0 0.0
    %104 = vmatpush.msra.mxu0 0.0
    %105 = vmatpush.msra.mxu0 0.0
    %106 = vmatpush.msra.mxu0 0.0
    %107 = vmatpush.msra.mxu0 %v84
    %108 = vmatpush.msra.mxu0 %v83
    %109 = vmatmul.f32.gmra.mxu0 %v91
    %v110 = vpop.f32.mrf.mxu0
    %v111 = vadd.f32 %v87, %v110
    %112 = vdwg.mxu0
    %113 = vst [vmem:[#allocation4] sm:$0xff] %v111
    %v114 = vld [vmem:[#allocation10] sm:$0xff]
    %v115 = vld [vmem:[#allocation10 + $0x8] sm:$0xff]
    %v116 = vld [vmem:[#allocation10 + $0x10] sm:$0xff]
    %v117 = vld [vmem:[#allocation10 + $0x18] sm:$0xff]
    %v118 = vld [vmem:[#allocation2] sm:$0x1]
    %v119 = vld [vmem:[#allocation3] sm:$0x1]
    %v120 = vld [vmem:[#allocation4] sm:$0x1]
    %vm121 = vcmask 261120
    %v123 = vsel %vm121, %v118, 0
    %125 = vmatpush.msra.mxu0 0.0
    %126 = vmatpush.msra.mxu0 0.0
    %127 = vmatpush.msra.mxu0 0.0
    %128 = vmatpush.msra.mxu0 0.0
    %129 = vmatpush.msra.mxu0 0.0
    %130 = vmatpush.msra.mxu0 0.0
    %131 = vmatpush.msra.mxu0 0.0
    %132 = vmatpush.msra.mxu0 0.0
    %133 = vmatpush.msra.mxu0 0.0
    %134 = vmatpush.msra.mxu0 0.0
    %135 = vmatpush.msra.mxu0 0.0
    %136 = vmatpush.msra.mxu0 0.0
    %137 = vmatpush.msra.mxu0 %v117
    %138 = vmatpush.msra.mxu0 %v116
    %139 = vmatpush.msra.mxu0 %v115
    %140 = vmatpush.msra.mxu0 %v114
    %141 = vmatmul.f32.gmra.mxu0 %v123
    %v142 = vpop.f32.mrf.mxu0
    %v143 = vadd.f32 0.0, %v142
    %144 = vdwg.mxu0
    %v145 = vadd.f32 %v120, %v143
    %v146 = vxor.u32 %v145, 2147483648
    %v147 = vmul.f32 %v146, 1.442695
    %v148 = vpow.pop %v147
    %v149 = vadd.f32 %v148, 1.0
    %v150 = vrcp.pop %v149
    %v151 = vmul.f32 %v149, %v150
    %v152 = vsub.f32 1.0, %v151
    %v153 = vmul.f32 %v150, %v152
    %v154 = vadd.f32 %v150, %v153
    %vm155 = vweird.f32 %v149
    %vm156 = vweird.f32 %v150
    %vm157 = vmor %vm155, %vm156
    %v158 = vsel %vm157, %v150, %v154
    %v159 = vand.u32 2147483647, %v149
    %vm160 = vcmp.eq.f32.partialorder %v159, 8.507059e+37
    %v161 = vand.u32 %v149, 2147483648
    %v162 = vor.u32 1.1754944e-38, %v161
    %v163 = vsel %vm160, %v162, %v158
    %v164 = vmul.f32 1.0, %v163
    %v165 = vtanh.pop %v145
    %v167 = vperm.slane %v119, 0
    %168 = vrot.lane.b32.xlu0 %v167, 32
    %v169 = vpop.permute.xlu0 %168
    %v171 = vmul.f32 %v164, %v169
    %173 = vrot.lane.b32.xlu0 %v165, 64
    %v174 = vpop.permute.xlu0 %173
    %v176 = vmul.f32 %v164, %v174
    %178 = vrot.lane.b32.xlu0 %v176, 32
    %v179 = vpop.permute.xlu0 %178
    %v181 = vadd.f32 %v171, %v179
    %v182 = vtanh.pop %v181
    %184 = vrot.lane.b32.xlu0 %v182, 64
    %v185 = vpop.permute.xlu0 %184
    %v187 = vmul.f32 %v164, %v185
    %189 = vrot.lane.b32.xlu0 %v187, 32
    %v190 = vpop.permute.xlu0 %189
    %vm192 = vcmask 253952
    %193 = vst.msk [vmem:[#allocation11] sm:$0x1] %vm192, %v190
    %v194 = vld [vmem:[#allocation4 + $0x1] sm:$0x1]
    %v195 = vsel %vm121, %v190, 0
    %197 = vmatpush.msra.mxu0 0.0
    %198 = vmatpush.msra.mxu0 0.0
    %199 = vmatpush.msra.mxu0 0.0
    %200 = vmatpush.msra.mxu0 0.0
    %201 = vmatpush.msra.mxu0 0.0
    %202 = vmatpush.msra.mxu0 0.0
    %203 = vmatpush.msra.mxu0 0.0
    %204 = vmatpush.msra.mxu0 0.0
    %205 = vmatpush.msra.mxu0 0.0
    %206 = vmatpush.msra.mxu0 0.0
    %207 = vmatpush.msra.mxu0 0.0
    %208 = vmatpush.msra.mxu0 0.0
    %209 = vmatpush.msra.mxu0 %v117
    %210 = vmatpush.msra.mxu0 %v116
    %211 = vmatpush.msra.mxu0 %v115
    %212 = vmatpush.msra.mxu0 %v114
    %213 = vmatmul.f32.gmra.mxu0 %v195
    %v214 = vpop.f32.mrf.mxu0
    %v215 = vadd.f32 0.0, %v214
    %216 = vdwg.mxu0
    %v217 = vadd.f32 %v194, %v215
    %v218 = vxor.u32 %v217, 2147483648
    %v219 = vmul.f32 %v218, 1.442695
    %v220 = vpow.pop %v219
    %v221 = vadd.f32 %v220, 1.0
    %v222 = vrcp.pop %v221
    %v223 = vmul.f32 %v221, %v222
    %v224 = vsub.f32 1.0, %v223
    %v225 = vmul.f32 %v222, %v224
    %v226 = vadd.f32 %v222, %v225
    %vm227 = vweird.f32 %v221
    %vm228 = vweird.f32 %v222
    %vm229 = vmor %vm227, %vm228
    %v230 = vsel %vm229, %v222, %v226
    %v231 = vand.u32 2147483647, %v221
    %vm232 = vcmp.eq.f32.partialorder %v231, 8.507059e+37
    %v233 = vand.u32 %v221, 2147483648
    %v234 = vor.u32 1.1754944e-38, %v233
    %v235 = vsel %vm232, %v234, %v230
    %v236 = vmul.f32 1.0, %v235
    %v237 = vtanh.pop %v217
    %v238 = vmul.f32 %v236, %v181
    %240 = vrot.lane.b32.xlu0 %v237, 64
    %v241 = vpop.permute.xlu0 %240
    %v243 = vmul.f32 %v236, %v241
    %245 = vrot.lane.b32.xlu0 %v243, 32
    %v246 = vpop.permute.xlu0 %245
    %v248 = vadd.f32 %v238, %v246
    %v249 = vtanh.pop %v248
    %251 = vrot.lane.b32.xlu0 %v249, 64
    %v252 = vpop.permute.xlu0 %251
    %v254 = vmul.f32 %v236, %v252
    %256 = vrot.lane.b32.xlu0 %v254, 32
    %v257 = vpop.permute.xlu0 %256
    %259 = vst.msk [vmem:[#allocation11 + $0x1] sm:$0x1] %vm192, %v257
    %v260 = vld [vmem:[#allocation4 + $0x2] sm:$0x1]
    %v261 = vsel %vm121, %v257, 0
    %263 = vmatpush.msra.mxu0 0.0
    %264 = vmatpush.msra.mxu0 0.0
    %265 = vmatpush.msra.mxu0 0.0
    %266 = vmatpush.msra.mxu0 0.0
    %267 = vmatpush.msra.mxu0 0.0
    %268 = vmatpush.msra.mxu0 0.0
    %269 = vmatpush.msra.mxu0 0.0
    %270 = vmatpush.msra.mxu0 0.0
    %271 = vmatpush.msra.mxu0 0.0
    %272 = vmatpush.msra.mxu0 0.0
    %273 = vmatpush.msra.mxu0 0.0
    %274 = vmatpush.msra.mxu0 0.0
    %275 = vmatpush.msra.mxu0 %v117
    %276 = vmatpush.msra.mxu0 %v116
    %277 = vmatpush.msra.mxu0 %v115
    %278 = vmatpush.msra.mxu0 %v114
    %279 = vmatmul.f32.gmra.mxu0 %v261
    %v280 = vpop.f32.mrf.mxu0
    %v281 = vadd.f32 0.0, %v280
    %282 = vdwg.mxu0
    %v283 = vadd.f32 %v260, %v281
    %v284 = vxor.u32 %v283, 2147483648
    %v285 = vmul.f32 %v284, 1.442695
    %v286 = vpow.pop %v285
    %v287 = vadd.f32 %v286, 1.0
    %v288 = vrcp.pop %v287
    %v289 = vmul.f32 %v287, %v288
    %v290 = vsub.f32 1.0, %v289
    %v291 = vmul.f32 %v288, %v290
    %v292 = vadd.f32 %v288, %v291
    %vm293 = vweird.f32 %v287
    %vm294 = vweird.f32 %v288
    %vm295 = vmor %vm293, %vm294
    %v296 = vsel %vm295, %v288, %v292
    %v297 = vand.u32 2147483647, %v287
    %vm298 = vcmp.eq.f32.partialorder %v297, 8.507059e+37
    %v299 = vand.u32 %v287, 2147483648
    %v300 = vor.u32 1.1754944e-38, %v299
    %v301 = vsel %vm298, %v300, %v296
    %v302 = vmul.f32 1.0, %v301
    %v303 = vtanh.pop %v283
    %v304 = vmul.f32 %v302, %v248
    %306 = vrot.lane.b32.xlu0 %v303, 64
    %v307 = vpop.permute.xlu0 %306
    %v309 = vmul.f32 %v302, %v307
    %311 = vrot.lane.b32.xlu0 %v309, 32
    %v312 = vpop.permute.xlu0 %311
    %v314 = vadd.f32 %v304, %v312
    %v315 = vtanh.pop %v314
    %317 = vrot.lane.b32.xlu0 %v315, 64
    %v318 = vpop.permute.xlu0 %317
    %v320 = vmul.f32 %v302, %v318
    %322 = vrot.lane.b32.xlu0 %v320, 32
    %v323 = vpop.permute.xlu0 %322
    %325 = vst.msk [vmem:[#allocation11 + $0x2] sm:$0x1] %vm192, %v323
    %v326 = vld [vmem:[#allocation4 + $0x3] sm:$0x1]
    %v327 = vsel %vm121, %v323, 0
    %329 = vmatpush.msra.mxu0 0.0
    %330 = vmatpush.msra.mxu0 0.0
    %331 = vmatpush.msra.mxu0 0.0
    %332 = vmatpush.msra.mxu0 0.0
    %333 = vmatpush.msra.mxu0 0.0
    %334 = vmatpush.msra.mxu0 0.0
    %335 = vmatpush.msra.mxu0 0.0
    %336 = vmatpush.msra.mxu0 0.0
    %337 = vmatpush.msra.mxu0 0.0
    %338 = vmatpush.msra.mxu0 0.0
    %339 = vmatpush.msra.mxu0 0.0
    %340 = vmatpush.msra.mxu0 0.0
    %341 = vmatpush.msra.mxu0 %v117
    %342 = vmatpush.msra.mxu0 %v116
    %343 = vmatpush.msra.mxu0 %v115
    %344 = vmatpush.msra.mxu0 %v114
    %345 = vmatmul.f32.gmra.mxu0 %v327
    %v346 = vpop.f32.mrf.mxu0
    %v347 = vadd.f32 0.0, %v346
    %348 = vdwg.mxu0
    %v349 = vadd.f32 %v326, %v347
    %v350 = vxor.u32 %v349, 2147483648
    %v351 = vmul.f32 %v350, 1.442695
    %v352 = vpow.pop %v351
    %v353 = vadd.f32 %v352, 1.0
    %v354 = vrcp.pop %v353
    %v355 = vmul.f32 %v353, %v354
    %v356 = vsub.f32 1.0, %v355
    %v357 = vmul.f32 %v354, %v356
    %v358 = vadd.f32 %v354, %v357
    %vm359 = vweird.f32 %v353
    %vm360 = vweird.f32 %v354
    %vm361 = vmor %vm359, %vm360
    %v362 = vsel %vm361, %v354, %v358
    %v363 = vand.u32 2147483647, %v353
    %vm364 = vcmp.eq.f32.partialorder %v363, 8.507059e+37
    %v365 = vand.u32 %v353, 2147483648
    %v366 = vor.u32 1.1754944e-38, %v365
    %v367 = vsel %vm364, %v366, %v362
    %v368 = vmul.f32 1.0, %v367
    %v369 = vtanh.pop %v349
    %v370 = vmul.f32 %v368, %v314
    %372 = vrot.lane.b32.xlu0 %v369, 64
    %v373 = vpop.permute.xlu0 %372
    %v375 = vmul.f32 %v368, %v373
    %377 = vrot.lane.b32.xlu0 %v375, 32
    %v378 = vpop.permute.xlu0 %377
    %v380 = vadd.f32 %v370, %v378
    %v381 = vtanh.pop %v380
    %383 = vrot.lane.b32.xlu0 %v381, 64
    %v384 = vpop.permute.xlu0 %383
    %v386 = vmul.f32 %v368, %v384
    %388 = vrot.lane.b32.xlu0 %v386, 32
    %v389 = vpop.permute.xlu0 %388
    %391 = vst.msk [vmem:[#allocation11 + $0x3] sm:$0x1] %vm192, %v389
    %v392 = vld [vmem:[#allocation4 + $0x4] sm:$0x1]
    %v393 = vsel %vm121, %v389, 0
    %395 = vmatpush.msra.mxu0 0.0
    %396 = vmatpush.msra.mxu0 0.0
    %397 = vmatpush.msra.mxu0 0.0
    %398 = vmatpush.msra.mxu0 0.0
    %399 = vmatpush.msra.mxu0 0.0
    %400 = vmatpush.msra.mxu0 0.0
    %401 = vmatpush.msra.mxu0 0.0
    %402 = vmatpush.msra.mxu0 0.0
    %403 = vmatpush.msra.mxu0 0.0
    %404 = vmatpush.msra.mxu0 0.0
    %405 = vmatpush.msra.mxu0 0.0
    %406 = vmatpush.msra.mxu0 0.0
    %407 = vmatpush.msra.mxu0 %v117
    %408 = vmatpush.msra.mxu0 %v116
    %409 = vmatpush.msra.mxu0 %v115
    %410 = vmatpush.msra.mxu0 %v114
    %411 = vmatmul.f32.gmra.mxu0 %v393
    %v412 = vpop.f32.mrf.mxu0
    %v413 = vadd.f32 0.0, %v412
    %414 = vdwg.mxu0
    %v415 = vadd.f32 %v392, %v413
    %v416 = vxor.u32 %v415, 2147483648
    %v417 = vmul.f32 %v416, 1.442695
    %v418 = vpow.pop %v417
    %v419 = vadd.f32 %v418, 1.0
    %v420 = vrcp.pop %v419
    %v421 = vmul.f32 %v419, %v420
    %v422 = vsub.f32 1.0, %v421
    %v423 = vmul.f32 %v420, %v422
    %v424 = vadd.f32 %v420, %v423
    %vm425 = vweird.f32 %v419
    %vm426 = vweird.f32 %v420
    %vm427 = vmor %vm425, %vm426
    %v428 = vsel %vm427, %v420, %v424
    %v429 = vand.u32 2147483647, %v419
    %vm430 = vcmp.eq.f32.partialorder %v429, 8.507059e+37
    %v431 = vand.u32 %v419, 2147483648
    %v432 = vor.u32 1.1754944e-38, %v431
    %v433 = vsel %vm430, %v432, %v428
    %v434 = vmul.f32 1.0, %v433
    %v435 = vtanh.pop %v415
    %v436 = vmul.f32 %v434, %v380
    %438 = vrot.lane.b32.xlu0 %v435, 64
    %v439 = vpop.permute.xlu0 %438
    %v441 = vmul.f32 %v434, %v439
    %443 = vrot.lane.b32.xlu0 %v441, 32
    %v444 = vpop.permute.xlu0 %443
    %v446 = vadd.f32 %v436, %v444
    %v447 = vtanh.pop %v446
    %449 = vrot.lane.b32.xlu0 %v447, 64
    %v450 = vpop.permute.xlu0 %449
    %v452 = vmul.f32 %v434, %v450
    %454 = vrot.lane.b32.xlu0 %v452, 32
    %v455 = vpop.permute.xlu0 %454
    %457 = vst.msk [vmem:[#allocation11 + $0x4] sm:$0x1] %vm192, %v455
    %v458 = vld [vmem:[#allocation4 + $0x5] sm:$0x1]
    %v459 = vsel %vm121, %v455, 0
    %461 = vmatpush.msra.mxu0 0.0
    %462 = vmatpush.msra.mxu0 0.0
    %463 = vmatpush.msra.mxu0 0.0
    %464 = vmatpush.msra.mxu0 0.0
    %465 = vmatpush.msra.mxu0 0.0
    %466 = vmatpush.msra.mxu0 0.0
    %467 = vmatpush.msra.mxu0 0.0
    %468 = vmatpush.msra.mxu0 0.0
    %469 = vmatpush.msra.mxu0 0.0
    %470 = vmatpush.msra.mxu0 0.0
    %471 = vmatpush.msra.mxu0 0.0
    %472 = vmatpush.msra.mxu0 0.0
    %473 = vmatpush.msra.mxu0 %v117
    %474 = vmatpush.msra.mxu0 %v116
    %475 = vmatpush.msra.mxu0 %v115
    %476 = vmatpush.msra.mxu0 %v114
    %477 = vmatmul.f32.gmra.mxu0 %v459
    %v478 = vpop.f32.mrf.mxu0
    %v479 = vadd.f32 0.0, %v478
    %480 = vdwg.mxu0
    %v481 = vadd.f32 %v458, %v479
    %v482 = vxor.u32 %v481, 2147483648
    %v483 = vmul.f32 %v482, 1.442695
    %v484 = vpow.pop %v483
    %v485 = vadd.f32 %v484, 1.0
    %v486 = vrcp.pop %v485
    %v487 = vmul.f32 %v485, %v486
    %v488 = vsub.f32 1.0, %v487
    %v489 = vmul.f32 %v486, %v488
    %v490 = vadd.f32 %v486, %v489
    %vm491 = vweird.f32 %v485
    %vm492 = vweird.f32 %v486
    %vm493 = vmor %vm491, %vm492
    %v494 = vsel %vm493, %v486, %v490
    %v495 = vand.u32 2147483647, %v485
    %vm496 = vcmp.eq.f32.partialorder %v495, 8.507059e+37
    %v497 = vand.u32 %v485, 2147483648
    %v498 = vor.u32 1.1754944e-38, %v497
    %v499 = vsel %vm496, %v498, %v494
    %v500 = vmul.f32 1.0, %v499
    %v501 = vtanh.pop %v481
    %v502 = vmul.f32 %v500, %v446
    %504 = vrot.lane.b32.xlu0 %v501, 64
    %v505 = vpop.permute.xlu0 %504
    %v507 = vmul.f32 %v500, %v505
    %509 = vrot.lane.b32.xlu0 %v507, 32
    %v510 = vpop.permute.xlu0 %509
    %v512 = vadd.f32 %v502, %v510
    %v513 = vtanh.pop %v512
    %515 = vrot.lane.b32.xlu0 %v513, 64
    %v516 = vpop.permute.xlu0 %515
    %v518 = vmul.f32 %v500, %v516
    %520 = vrot.lane.b32.xlu0 %v518, 32
    %v521 = vpop.permute.xlu0 %520
    %523 = vst.msk [vmem:[#allocation11 + $0x5] sm:$0x1] %vm192, %v521
    %v524 = vld [vmem:[#allocation4 + $0x6] sm:$0x1]
    %v525 = vsel %vm121, %v521, 0
    %527 = vmatpush.msra.mxu0 0.0
    %528 = vmatpush.msra.mxu0 0.0
    %529 = vmatpush.msra.mxu0 0.0
    %530 = vmatpush.msra.mxu0 0.0
    %531 = vmatpush.msra.mxu0 0.0
    %532 = vmatpush.msra.mxu0 0.0
    %533 = vmatpush.msra.mxu0 0.0
    %534 = vmatpush.msra.mxu0 0.0
    %535 = vmatpush.msra.mxu0 0.0
    %536 = vmatpush.msra.mxu0 0.0
    %537 = vmatpush.msra.mxu0 0.0
    %538 = vmatpush.msra.mxu0 0.0
    %539 = vmatpush.msra.mxu0 %v117
    %540 = vmatpush.msra.mxu0 %v116
    %541 = vmatpush.msra.mxu0 %v115
    %542 = vmatpush.msra.mxu0 %v114
    %543 = vmatmul.f32.gmra.mxu0 %v525
    %v544 = vpop.f32.mrf.mxu0
    %v545 = vadd.f32 0.0, %v544
    %546 = vdwg.mxu0
    %v547 = vadd.f32 %v524, %v545
    %v548 = vxor.u32 %v547, 2147483648
    %v549 = vmul.f32 %v548, 1.442695
    %v550 = vpow.pop %v549
    %v551 = vadd.f32 %v550, 1.0
    %v552 = vrcp.pop %v551
    %v553 = vmul.f32 %v551, %v552
    %v554 = vsub.f32 1.0, %v553
    %v555 = vmul.f32 %v552, %v554
    %v556 = vadd.f32 %v552, %v555
    %vm557 = vweird.f32 %v551
    %vm558 = vweird.f32 %v552
    %vm559 = vmor %vm557, %vm558
    %v560 = vsel %vm559, %v552, %v556
    %v561 = vand.u32 2147483647, %v551
    %vm562 = vcmp.eq.f32.partialorder %v561, 8.507059e+37
    %v563 = vand.u32 %v551, 2147483648
    %v564 = vor.u32 1.1754944e-38, %v563
    %v565 = vsel %vm562, %v564, %v560
    %v566 = vmul.f32 1.0, %v565
    %v567 = vtanh.pop %v547
    %v568 = vmul.f32 %v566, %v512
    %570 = vrot.lane.b32.xlu0 %v567, 64
    %v571 = vpop.permute.xlu0 %570
    %v573 = vmul.f32 %v566, %v571
    %575 = vrot.lane.b32.xlu0 %v573, 32
    %v576 = vpop.permute.xlu0 %575
    %v578 = vadd.f32 %v568, %v576
    %v579 = vtanh.pop %v578
    %581 = vrot.lane.b32.xlu0 %v579, 64
    %v582 = vpop.permute.xlu0 %581
    %v584 = vmul.f32 %v566, %v582
    %586 = vrot.lane.b32.xlu0 %v584, 32
    %v587 = vpop.permute.xlu0 %586
    %589 = vst.msk [vmem:[#allocation11 + $0x6] sm:$0x1] %vm192, %v587
    %v590 = vld [vmem:[#allocation4 + $0x7] sm:$0x1]
    %v591 = vsel %vm121, %v587, 0
    %593 = vmatpush.msra.mxu0 0.0
    %594 = vmatpush.msra.mxu0 0.0
    %595 = vmatpush.msra.mxu0 0.0
    %596 = vmatpush.msra.mxu0 0.0
    %597 = vmatpush.msra.mxu0 0.0
    %598 = vmatpush.msra.mxu0 0.0
    %599 = vmatpush.msra.mxu0 0.0
    %600 = vmatpush.msra.mxu0 0.0
    %601 = vmatpush.msra.mxu0 0.0
    %602 = vmatpush.msra.mxu0 0.0
    %603 = vmatpush.msra.mxu0 0.0
    %604 = vmatpush.msra.mxu0 0.0
    %605 = vmatpush.msra.mxu0 %v117
    %606 = vmatpush.msra.mxu0 %v116
    %607 = vmatpush.msra.mxu0 %v115
    %608 = vmatpush.msra.mxu0 %v114
    %609 = vmatmul.f32.gmra.mxu0 %v591
    %v610 = vpop.f32.mrf.mxu0
    %v611 = vadd.f32 0.0, %v610
    %612 = vdwg.mxu0
    %v613 = vadd.f32 %v590, %v611
    %v614 = vxor.u32 %v613, 2147483648
    %v615 = vmul.f32 %v614, 1.442695
    %v616 = vpow.pop %v615
    %v617 = vadd.f32 %v616, 1.0
    %v618 = vrcp.pop %v617
    %v619 = vmul.f32 %v617, %v618
    %v620 = vsub.f32 1.0, %v619
    %v621 = vmul.f32 %v618, %v620
    %v622 = vadd.f32 %v618, %v621
    %vm623 = vweird.f32 %v617
    %vm624 = vweird.f32 %v618
    %vm625 = vmor %vm623, %vm624
    %v626 = vsel %vm625, %v618, %v622
    %v627 = vand.u32 2147483647, %v617
    %vm628 = vcmp.eq.f32.partialorder %v627, 8.507059e+37
    %v629 = vand.u32 %v617, 2147483648
    %v630 = vor.u32 1.1754944e-38, %v629
    %v631 = vsel %vm628, %v630, %v626
    %v632 = vmul.f32 1.0, %v631
    %v633 = vtanh.pop %v613
    %v634 = vmul.f32 %v632, %v578
    %636 = vrot.lane.b32.xlu0 %v633, 64
    %v637 = vpop.permute.xlu0 %636
    %v639 = vmul.f32 %v632, %v637
    %641 = vrot.lane.b32.xlu0 %v639, 32
    %v642 = vpop.permute.xlu0 %641
    %v644 = vadd.f32 %v634, %v642
    %v645 = vtanh.pop %v644
    %647 = vrot.lane.b32.xlu0 %v645, 64
    %v648 = vpop.permute.xlu0 %647
    %v650 = vmul.f32 %v632, %v648
    %652 = vrot.lane.b32.xlu0 %v650, 32
    %v653 = vpop.permute.xlu0 %652
    %655 = vst.msk [vmem:[#allocation11 + $0x7] sm:$0x1] %vm192, %v653
    %656 = vst.msk [vmem:[#allocation2] sm:$0x1] %vm192, %v653
    %658 = vrot.lane.b32.xlu0 %v644, 96
    %v659 = vpop.permute.xlu0 %658
    %661 = vst.msk [vmem:[#allocation3] sm:$0x1] %vm192, %v659
    // Predicated region
    $region42: #{tpu_custom_call.1} parent=1 // pred_check
      %p662 = pneg %p73
    $region43: #{tpu_custom_call.1} parent=1 // pred_check_branch
      %664 = sbr.rel (%p662) target = $region45
    $region44: #{tpu_custom_call.1} parent=1 // pred_region
      %665 = vst.msk [vmem:[#allocation12] sm:$0x1] %vm192, %v653
      %666 = vst.msk [vmem:[#allocation14] sm:$0x1] %vm192, %v659
    $region45: #{tpu_custom_call.1} parent=1 // pred_fallthru
      _
    // Predicated region
    $region46: #{tpu_custom_call.1} parent=1 // pred_check
      _
    $region47: #{tpu_custom_call.1} parent=1 // pred_check_branch
      %668 = sbr.rel (0) target = $region49
    $region48: #{tpu_custom_call.1} parent=1 // pred_region
      %670 = vsyncadd [#allocation7], 0
      %s672 = sshll.u32 [#allocation11], 4
      %s673 = int_to_ptr.vmem [resolvable:$true] %s672
      %s674 = sshll.u32 %s6, 4
      %s675 = int_to_ptr.hbm [resolvable:$true] %s674
      %677 = dma.vmem_to_hbm [thread:$0]  %s673, 128, %s675, [#allocation7]
    $region49: #{tpu_custom_call.1} parent=1 // pred_fallthru
      _
    // Predicated region
    $region50: #{tpu_custom_call.1} parent=1 // pred_check
      _
    $region51: #{tpu_custom_call.1} parent=1 // pred_check_branch
      %679 = sbr.rel (0) target = $region53
    $region52: #{tpu_custom_call.1} parent=1 // pred_region
      %681 = vsyncadd [#allocation13], 0
      %s683 = sshll.u32 [#allocation12], 4
      %s684 = int_to_ptr.vmem [resolvable:$true] %s683
      %s685 = sshll.u32 %s7, 4
      %s686 = int_to_ptr.hbm [resolvable:$true] %s685
      %688 = dma.vmem_to_hbm [thread:$0]  %s684, 16, %s686, [#allocation13]
    $region53: #{tpu_custom_call.1} parent=1 // pred_fallthru
      _
    // Predicated region
    $region54: #{tpu_custom_call.1} parent=1 // pred_check
      _
    $region55: #{tpu_custom_call.1} parent=1 // pred_check_branch
      %690 = sbr.rel (0) target = $region57
    $region56: #{tpu_custom_call.1} parent=1 // pred_region
      %692 = vsyncadd [#allocation13], 0
      %s694 = sshll.u32 [#allocation14], 4
      %s695 = int_to_ptr.vmem [resolvable:$true] %s694
      %s696 = sshll.u32 %s8, 4
      %s697 = int_to_ptr.hbm [resolvable:$true] %s696
      %699 = dma.vmem_to_hbm [thread:$0]  %s695, 16, %s697, [#allocation13]
    $region57: #{tpu_custom_call.1} parent=1 // pred_fallthru
      _
    // Predicated region
    $region58: #{tpu_custom_call.1} parent=1 // pred_check
      _
    $region59: #{tpu_custom_call.1} parent=1 // pred_check_branch
      %701 = sbr.rel (0) target = $region61
    $region60: #{tpu_custom_call.1} parent=1 // pred_region
      %703 = dma.done [#allocation7], 128
    $region61: #{tpu_custom_call.1} parent=1 // pred_fallthru
      _
    // Predicated region
    $region62: #{tpu_custom_call.1} parent=1 // pred_check
      _
    $region63: #{tpu_custom_call.1} parent=1 // pred_check_branch
      %705 = sbr.rel (0) target = $region65
    $region64: #{tpu_custom_call.1} parent=1 // pred_region
      %707 = dma.done [#allocation13], 16
    $region65: #{tpu_custom_call.1} parent=1 // pred_fallthru
      _
    // Predicated region
    $region66: #{tpu_custom_call.1} parent=1 // pred_check
      _
    $region67: #{tpu_custom_call.1} parent=1 // pred_check_branch
      %709 = sbr.rel (0) target = $region69
    $region68: #{tpu_custom_call.1} parent=1 // pred_region
      %711 = dma.done [#allocation13], 16
    $region69: #{tpu_custom_call.1} parent=1 // pred_fallthru
      _
    %712 = vsyncpa [#allocation6], 1
    %713 = vsyncpa [#allocation9], 1
    %714 = vsyncpa [#allocation7], 1
    %715 = vsyncpa [#allocation13], 1

</llo_original>
